<compile_context>
chip_gen: v5e
topology: v5e:2x2
jax: 0.10.0
libtpu: 0.0.40
codegen_flags: <defaults>
</compile_context>

<pallas_src>
import functools

import jax
import jax.numpy as jnp
from jax.experimental import pallas as pl
from jax.experimental.pallas import tpu as pltpu


def _round_up(x, m):
    return (x + m - 1) // m * m


def _ccbn_kernel(inv_nhw, eps, x_ref, gain_ref, bias_ref, o_ref):
    """One channel tile.

    x_ref / o_ref      : (N, Cb, HW) in the caller's dtype.
    gain_ref / bias_ref: (Cb, N) float32, channel-major so the block is
                         sublane-major (lane-dense small tiles).
    """
    f32 = jnp.float32

    # Pass 1: per-channel mean.  Collapse N first (cross-vreg VALU adds), then
    # one lane reduction per channel row (XLU) -> ~1/N the XLU work of a naive
    # combined reduce.
    s = jnp.sum(x_ref[...].astype(f32), axis=0)               # (Cb, HW)
    mean = jnp.sum(s, axis=-1, keepdims=True) * inv_nhw       # (Cb, 1)

    # Pass 2: centered variance.  Re-read x_ref instead of holding a centered
    # full-tile temporary across passes (halves peak VMEM pressure).
    d = x_ref[...].astype(f32) - mean[None, :, :]
    s2 = jnp.sum(d * d, axis=0)                                # (Cb, HW)
    var = jnp.sum(s2, axis=-1, keepdims=True) * inv_nhw        # (Cb, 1)

    scale = jax.lax.rsqrt(var + eps)                           # (Cb, 1)  EUP

    # Fold mean + rsqrt into the per-(c, n) conditional affine, transpose the
    # tiny (Cb, N) params once, so the streaming write pass is exactly one
    # multiply and one add per element.
    a_t = gain_ref[...] * scale                                # (Cb, N)
    b_t = bias_ref[...] - mean * a_t                           # (Cb, N)
    a = a_t.T[:, :, None]                                      # (N, Cb, 1)
    b = b_t.T[:, :, None]                                      # (N, Cb, 1)

    # Pass 3: out = x * a + b, stored in the caller's dtype.
    o_ref[...] = (x_ref[...].astype(f32) * a + b).astype(o_ref.dtype)


def _vmem_capacity_bytes():
    """Per-TensorCore VMEM capacity; conservative fallback if query fails."""
    try:
        cap = int(pltpu.get_tpu_info().vmem_capacity_bytes)
        if cap >= (32 << 20):
            return cap
    except Exception:
        pass
    return 64 << 20  # v7x per-TC VMEM; safe lower bound for v5e/v6e as well


def _choose_c_blk(N, C, HW, itemsize, budget_bytes):
    """Pick (c_blk, c_pad): channel block + (possibly padded) channel extent.

    c_blk is always either the full channel extent or a multiple of the native
    sublane tile (8 f32 / 16 bf16 / 32 int8), so the block layout is legal.
    """
    sub = 8 * (4 // itemsize)                     # native sublane multiple
    # Per-channel double-buffered pipeline footprint:
    #   2x in + 2x out x-tiles, f32 stat rows, lane-padded gain/bias tiles.
    per_chan = (4 * N * HW * itemsize
                + 8 * _round_up(HW, 128)
                + 4 * 2 * 2 * 128)
    max_cb = max(sub, budget_bytes // per_chan)

    if C <= max_cb:
        # Whole extent fits one tile; still prefer >= 2 grid steps so both
        # v7x TensorCores (and the DMA pipeline) have work.
        if C >= 64 and C % (2 * sub) == 0:
            return C // 2, C
        return C, C

    # Largest sublane-aligned divisor of C within budget -> exact grid.
    cb = (max_cb // sub) * sub
    best = 0
    while cb >= sub:
        if C % cb == 0:
            best = cb
            break
        cb -= sub
    if best >= max(sub, max_cb // 4):
        return best, C

    # Fallback: pad channels up to a multiple of a large, aligned block
    # (avoids collapsing into hundreds of tiny, layout-illegal tiles).
    cb = (max_cb // sub) * sub
    return cb, _round_up(C, cb)


def ccbn_forward(x_nchw, y, w_gain, b_gain, w_bias, b_bias, eps=1e-5):
    """ccbn forward (norm_style='bn', training-mode batch stats).

    x_nchw: (N, C, H, W) float dtype; y: (N, Din);
    w_*: (C, Din) torch-Linear weights; b_*: (C,).
    """
    N, C, H, W = x_nchw.shape
    HW = H * W
    x = x_nchw.reshape(N, C, HW)          # keep caller dtype: no HBM upcast copy
    itemsize = jnp.dtype(x.dtype).itemsize

    # Tiny (N x Din x C) gain/bias matmuls hoisted to XLA.  Passed channel-major
    # (C, N) so the kernel-side blocks are (c_blk, N): sublane = channel block
    # (multiple of 8 or full), lane = N -> KB-scale, lane-dense tiles.
    y32 = y.astype(jnp.float32)
    gain = (1.0 + y32 @ jnp.asarray(w_gain, jnp.float32).T
            + jnp.asarray(b_gain, jnp.float32)).T              # (C, N)
    bias = (y32 @ jnp.asarray(w_bias, jnp.float32).T
            + jnp.asarray(b_bias, jnp.float32)).T              # (C, N)

    # Generation-aware VMEM budgeting: ~75% of per-core VMEM as the scoped
    # limit, half of that for the double-buffered pipeline working set.
    capacity = _vmem_capacity_bytes()
    vmem_limit = (capacity * 3) // 4
    budget = vmem_limit // 2
    c_blk, c_pad = _choose_c_blk(N, C, HW, itemsize, budget)

    if c_pad != C:
        # Rare fallback: channel count not sublane-tileable within budget.
        pad = c_pad - C
        x = jnp.pad(x, ((0, 0), (0, pad), (0, 0)))
        gain = jnp.pad(gain, ((0, pad), (0, 0)))
        bias = jnp.pad(bias, ((0, pad), (0, 0)))

    # Ensure the declared limit covers the chosen tile (+25% slack) even in the
    # forced-minimum-block case; never exceed physical capacity.
    est = (4 * N * c_blk * HW * itemsize + 8 * c_blk * _round_up(HW, 128)
           + 4 * c_blk * 512 + (4 << 20))
    vmem_limit = int(min(max(vmem_limit, est + est // 4), capacity))

    grid = (c_pad // c_blk,)
    kernel = functools.partial(_ccbn_kernel, 1.0 / float(N * HW), float(eps))

    out = pl.pallas_call(
        kernel,
        out_shape=jax.ShapeDtypeStruct((N, c_pad, HW), x.dtype),
        grid=grid,
        in_specs=[
            pl.BlockSpec((N, c_blk, HW), lambda c: (0, c, 0)),
            pl.BlockSpec((c_blk, N), lambda c: (c, 0)),
            pl.BlockSpec((c_blk, N), lambda c: (c, 0)),
        ],
        out_specs=pl.BlockSpec((N, c_blk, HW), lambda c: (0, c, 0)),
        compiler_params=pltpu.CompilerParams(
            dimension_semantics=("parallel",),   # channel tiles independent
            vmem_limit_bytes=vmem_limit,
        ),
        cost_estimate=pl.CostEstimate(
            flops=7 * N * c_pad * HW,
            transcendentals=c_pad,
            bytes_accessed=2 * N * c_pad * HW * itemsize + 2 * c_pad * N * 4,
        ),
    )(x, gain, bias)

    if c_pad != C:
        out = out[:, :C, :]
    # TODO(synk): running-stat (stored_mean/stored_var momentum) buffer updates
    # done inside training-mode F.batch_norm are a side effect not reproduced.
    # TODO(synk): very large per-channel extents (N*HW exceeding the budget even
    # at the minimum block) would want a second 'arbitrary' grid axis over HW
    # with partial-sum scratch; tiny spatial maps (HW % 128 != 0) would benefit
    # from a channels-last lane-dense layout.
    return out.reshape(N, C, H, W)


def ccbn_reference(x, y, w_gain, b_gain, w_bias, b_bias, eps=1e-5):
    x32 = x.astype(jnp.float32)
    gain = 1.0 + y @ w_gain.T + b_gain                     # (N, C)
    bias = y @ w_bias.T + b_bias                           # (N, C)
    m = jnp.mean(x32, axis=(0, 2, 3), keepdims=True)
    v = jnp.mean((x32 - m) ** 2, axis=(0, 2, 3), keepdims=True)
    xhat = (x32 - m) * jax.lax.rsqrt(v + eps)
    return xhat * gain[:, :, None, None] + bias[:, :, None, None]


if __name__ == "__main__":
    # Small shapes: batch=2, channels(output_size)=4, spatial=16x16, y dim=8.
    N, C, H, W, Din = 2, 4, 16, 16, 8

    key = jax.random.PRNGKey(0)
    kx, ky, kwg, kbg, kwb, kbb = jax.random.split(key, 6)
    x = jax.random.normal(kx, (N, C, H, W), dtype=jnp.float32)
    y = jax.random.normal(ky, (N, Din), dtype=jnp.float32)
    # torch Linear weight shape = (out_features, in_features).
    w_gain = 0.1 * jax.random.normal(kwg, (C, Din), dtype=jnp.float32)
    b_gain = 0.1 * jax.random.normal(kbg, (C,), dtype=jnp.float32)
    w_bias = 0.1 * jax.random.normal(kwb, (C, Din), dtype=jnp.float32)
    b_bias = 0.1 * jax.random.normal(kbb, (C,), dtype=jnp.float32)

    out = jax.block_until_ready(ccbn_forward(x, y, w_gain, b_gain, w_bias, b_bias))
    ref = ccbn_reference(x, y, w_gain, b_gain, w_bias, b_bias)
    assert out.shape == (N, C, H, W)
    err = float(jnp.max(jnp.abs(out - ref)))
    assert jnp.allclose(out, ref, atol=1e-4, rtol=1e-4), err

    # Dtype-preserving path: I/O stays bf16, stats accumulate in f32 in-kernel.
    out_bf16 = jax.block_until_ready(
        ccbn_forward(x.astype(jnp.bfloat16), y, w_gain, b_gain, w_bias, b_bias))
    assert out_bf16.dtype == jnp.bfloat16 and out_bf16.shape == (N, C, H, W)
    assert bool(jnp.all(jnp.isfinite(out_bf16.astype(jnp.float32))))

    print("KERNEL_OK")
</pallas_src>

<mosaic_0001>
module attributes {stable_mosaic.version = 11 : i64} {
  func.func @_ccbn_kernel(%arg0: i32, %arg1: memref<2x4x256xf32, #tpu.memory_space<vmem>>, %arg2: memref<4x2xf32, #tpu.memory_space<vmem>>, %arg3: memref<4x2xf32, #tpu.memory_space<vmem>>, %arg4: memref<2x4x256xf32, #tpu.memory_space<vmem>>) attributes {dimension_semantics = [#tpu.dimension_semantics<parallel>], iteration_bounds = array<i64: 1>, scalar_prefetch = 0 : i64, scratch_operands = 0 : i64, tpu.core_type = #tpu.core_type<tc>, window_params = [{transform_indices = @transform_0, window_bounds = array<i64: 2, 4, 256>}, {transform_indices = @transform_1, window_bounds = array<i64: 4, 2>}, {transform_indices = @transform_2, window_bounds = array<i64: 4, 2>}, {transform_indices = @transform_3, window_bounds = array<i64: 2, 4, 256>}]} {
    %c0 = arith.constant 0 : index
    %c0_0 = arith.constant 0 : index
    %c0_1 = arith.constant 0 : index
    %0 = vector.load %arg1[%c0, %c0_0, %c0_1] : memref<2x4x256xf32, #tpu.memory_space<vmem>>, vector<2x4x256xf32>
    %cst = arith.constant dense<0.000000e+00> : vector<4x256xf32>
    %1 = vector.multi_reduction <add>, %0, %cst [0] : vector<2x4x256xf32> to vector<4x256xf32>
    %cst_2 = arith.constant dense<0.000000e+00> : vector<4xf32>
    %2 = vector.multi_reduction <add>, %1, %cst_2 [1] : vector<4x256xf32> to vector<4xf32>
    %3 = vector.shape_cast %2 : vector<4xf32> to vector<4x1xf32>
    %cst_3 = arith.constant 0.001953125 : f32
    %4 = vector.broadcast %cst_3 : f32 to vector<4x1xf32>
    %5 = arith.mulf %3, %4 : vector<4x1xf32>
    %c0_4 = arith.constant 0 : index
    %c0_5 = arith.constant 0 : index
    %c0_6 = arith.constant 0 : index
    %6 = vector.load %arg1[%c0_4, %c0_5, %c0_6] : memref<2x4x256xf32, #tpu.memory_space<vmem>>, vector<2x4x256xf32>
    %7 = vector.shape_cast %5 : vector<4x1xf32> to vector<1x4x1xf32>
    %8 = vector.broadcast %7 : vector<1x4x1xf32> to vector<2x4x256xf32>
    %9 = arith.subf %6, %8 : vector<2x4x256xf32>
    %10 = arith.mulf %9, %9 : vector<2x4x256xf32>
    %cst_7 = arith.constant dense<0.000000e+00> : vector<4x256xf32>
    %11 = vector.multi_reduction <add>, %10, %cst_7 [0] : vector<2x4x256xf32> to vector<4x256xf32>
    %cst_8 = arith.constant dense<0.000000e+00> : vector<4xf32>
    %12 = vector.multi_reduction <add>, %11, %cst_8 [1] : vector<4x256xf32> to vector<4xf32>
    %13 = vector.shape_cast %12 : vector<4xf32> to vector<4x1xf32>
    %cst_9 = arith.constant 0.001953125 : f32
    %14 = vector.broadcast %cst_9 : f32 to vector<4x1xf32>
    %15 = arith.mulf %13, %14 : vector<4x1xf32>
    %cst_10 = arith.constant 9.99999974E-6 : f32
    %16 = vector.broadcast %cst_10 : f32 to vector<4x1xf32>
    %17 = arith.addf %15, %16 : vector<4x1xf32>
    %18 = math.rsqrt %17 : vector<4x1xf32>
    %c0_11 = arith.constant 0 : index
    %c0_12 = arith.constant 0 : index
    %19 = vector.load %arg2[%c0_11, %c0_12] : memref<4x2xf32, #tpu.memory_space<vmem>>, vector<4x2xf32>
    %20 = vector.broadcast %18 : vector<4x1xf32> to vector<4x2xf32>
    %21 = arith.mulf %19, %20 : vector<4x2xf32>
    %c0_13 = arith.constant 0 : index
    %c0_14 = arith.constant 0 : index
    %22 = vector.load %arg3[%c0_13, %c0_14] : memref<4x2xf32, #tpu.memory_space<vmem>>, vector<4x2xf32>
    %23 = vector.broadcast %5 : vector<4x1xf32> to vector<4x2xf32>
    %24 = arith.mulf %23, %21 : vector<4x2xf32>
    %25 = arith.subf %22, %24 : vector<4x2xf32>
    %26 = tpu.transpose %21, [1, 0] : vector<4x2xf32> -> vector<2x4xf32>
    %27 = vector.shape_cast %26 : vector<2x4xf32> to vector<2x4x1xf32>
    %28 = tpu.transpose %25, [1, 0] : vector<4x2xf32> -> vector<2x4xf32>
    %29 = vector.shape_cast %28 : vector<2x4xf32> to vector<2x4x1xf32>
    %c0_15 = arith.constant 0 : index
    %c0_16 = arith.constant 0 : index
    %c0_17 = arith.constant 0 : index
    %30 = vector.load %arg1[%c0_15, %c0_16, %c0_17] : memref<2x4x256xf32, #tpu.memory_space<vmem>>, vector<2x4x256xf32>
    %31 = vector.broadcast %27 : vector<2x4x1xf32> to vector<2x4x256xf32>
    %32 = arith.mulf %30, %31 : vector<2x4x256xf32>
    %33 = vector.broadcast %29 : vector<2x4x1xf32> to vector<2x4x256xf32>
    %34 = arith.addf %32, %33 : vector<2x4x256xf32>
    %c0_18 = arith.constant 0 : index
    %c0_19 = arith.constant 0 : index
    %c0_20 = arith.constant 0 : index
    %35 = vector.load %arg4[%c0_18, %c0_19, %c0_20] : memref<2x4x256xf32, #tpu.memory_space<vmem>>, vector<2x4x256xf32>
    tpu.vector_store %arg4[%c0_18, %c0_19, %c0_20], %34 {strides = array<i32>} : memref<2x4x256xf32, #tpu.memory_space<vmem>>, vector<2x4x256xf32>,
    return
  }
  func.func @transform_0(%arg0: i32) -> (i32, i32, i32) {
    %c0_i32 = arith.constant 0 : i32
    %c0_i32_0 = arith.constant 0 : i32
    %c0_i32_1 = arith.constant 0 : i32
    return %c0_i32, %arg0, %c0_i32_0 : i32, i32, i32
  }
  func.func @transform_1(%arg0: i32) -> (i32, i32) {
    %c0_i32 = arith.constant 0 : i32
    %c0_i32_0 = arith.constant 0 : i32
    return %arg0, %c0_i32 : i32, i32
  }
  func.func @transform_2(%arg0: i32) -> (i32, i32) {
    %c0_i32 = arith.constant 0 : i32
    %c0_i32_0 = arith.constant 0 : i32
    return %arg0, %c0_i32 : i32, i32
  }
  func.func @transform_3(%arg0: i32) -> (i32, i32, i32) {
    %c0_i32 = arith.constant 0 : i32
    %c0_i32_0 = arith.constant 0 : i32
    %c0_i32_1 = arith.constant 0 : i32
    return %c0_i32, %arg0, %c0_i32_0 : i32, i32, i32
  }
}

</mosaic_0001>

<llo_original>
// kernel: tpu_custom_call.1
$region0: #{tpu_custom_call.1}
  #allocation0 [shape = 'u32[]', space=smem, size = 0x4, offset = 0x4, fixed_abs, tag = 'smem constant byte address 0x4 - core index']
  #allocation1 [shape = 'u32[72,128]{1,0:T(1,128)}', space=vmem, size = 0x9000, scoped, tag = 'internal scratch']
  %s0 = inlined_call_operand.hbm [shape: f32[2,4,256], index: 0, kind: input, shape index: {}]
  %s1 = inlined_call_operand.vmem [shape: f32[4,2], index: 1, kind: input, shape index: {}]
  %s2 = inlined_call_operand.vmem [shape: f32[4,2], index: 2, kind: input, shape index: {}]
  %s3 = inlined_call_operand.hbm [shape: f32[2,4,256], index: 3, kind: output, shape index: {}]
  %s4 = sld [smem:[#allocation0]]
  $region26: #{tpu_custom_call.1} parent=0
    _
  %s6 = ssub.s32 1, %s4
  %s7 = scalar_select 0, %s6, %s4
  $region1: #{tpu_custom_call.1} parent=0
    #allocation2 [shape = 'u8[8192]{0}', space=vmem, size = 0x2000, scoped, tag = 'input window, operand 0, single buffered']
    #allocation3 [shape = 's32[1]{0}', space=sflag, size = 0x4, scoped, tag = 'scoped memory for tpu_custom_call.1']
    #allocation4 [shape = 's32[1]{0}', space=sflag, size = 0x4, scoped, tag = 'scoped memory for tpu_custom_call.1']
    #allocation5 [shape = 'u8[8192]{0}', space=vmem, size = 0x2000, scoped, tag = 'output window, operand 0, single buffered']
    %8 = vsyncpa [#allocation3], 0
    %9 = vsyncpa [#allocation4], 0
    // Predicated region
    $region2: #{tpu_custom_call.1} parent=1 // pred_check
      _
    $region3: #{tpu_custom_call.1} parent=1 // pred_check_branch
      %11 = sbr.rel (0) target = $region5
    $region4: #{tpu_custom_call.1} parent=1 // pred_region
      %13 = vsyncadd [#allocation3], 0
      %s14 = sshll.u32 %s0, 4
      %s15 = int_to_ptr.hbm [resolvable:$true] %s14
      %s16 = sshll.u32 [#allocation2], 4
      %s17 = int_to_ptr.vmem [resolvable:$true] %s16
      %22 = dma.hbm_to_vmem [thread:$0]  %s15, 256, %s17, [#allocation3], 128, 128, 8
    $region5: #{tpu_custom_call.1} parent=1 // pred_fallthru
      _
    // Predicated region
    $region6: #{tpu_custom_call.1} parent=1 // pred_check
      _
    $region7: #{tpu_custom_call.1} parent=1 // pred_check_branch
      %24 = sbr.rel (0) target = $region9
    $region8: #{tpu_custom_call.1} parent=1 // pred_region
      _
    $region9: #{tpu_custom_call.1} parent=1 // pred_fallthru
      _
    // Predicated region
    $region10: #{tpu_custom_call.1} parent=1 // pred_check
      _
    $region11: #{tpu_custom_call.1} parent=1 // pred_check_branch
      %26 = sbr.rel (0) target = $region13
    $region12: #{tpu_custom_call.1} parent=1 // pred_region
      _
    $region13: #{tpu_custom_call.1} parent=1 // pred_fallthru
      _
    // Predicated region
    $region14: #{tpu_custom_call.1} parent=1 // pred_check
      _
    $region15: #{tpu_custom_call.1} parent=1 // pred_check_branch
      %28 = sbr.rel (0) target = $region17
    $region16: #{tpu_custom_call.1} parent=1 // pred_region
      %30 = dma.done [#allocation3], 256
    $region17: #{tpu_custom_call.1} parent=1 // pred_fallthru
      _
    %v31 = vld [vmem:[#allocation2] sm:$0xff]
    %v32 = vld [vmem:[#allocation2 + $0x8] sm:$0xff]
    %35 = vst [vmem:[#allocation1] ss:$2 sm:$0xff] %v31
    %v36 = vld.sshfl [vmem:[#allocation1] sm:$0xff pattern:$0x75316420]
    %v37 = vld.sshfl [vmem:[#allocation1 + $0x8] sm:$0xff pattern:$0x75316420]
    %s38 = scalar_lea.vmem [#allocation1], 16
    %39 = vst [vmem:[%s38] ss:$2 sm:$0xff] %v32
    %v40 = vld.sshfl [vmem:[#allocation1 + $0x10] sm:$0xff pattern:$0x75316420]
    %v41 = vld.sshfl [vmem:[#allocation1 + $0x18] sm:$0xff pattern:$0x75316420]
    %vm46 = vcmask 1043456
    %v47 = vsel %vm46, %v36, 0.0
    %v48 = vsel %vm46, %v40, 0.0
    %v49 = vadd.f32 %v47, %v48
    %v50 = vsel %vm46, %v37, 0.0
    %v51 = vsel %vm46, %v41, 0.0
    %v52 = vadd.f32 %v50, %v51
    %v53 = vsel %vm46, %v49, 0.0
    %v54 = vsel %vm46, %v52, 0.0
    %v55 = vadd.f32 %v53, %v54
    %56 = vadd.xlane.f32.xlu0 %v55
    %v57 = vpop.xlane.xlu0 %56
    %v58 = vmul.f32 %v57, 0.001953125
    %v61 = vunpack.c.l.s4 839922192
    %v62 = vunpack.c.0.s8 %v61
    %v63 = vperm.slane %v58, %v62
    %v65 = vsub.f32 %v31, %v63
    %v66 = vsub.f32 %v32, %v63
    %v67 = vmul.f32 %v65, %v65
    %v68 = vmul.f32 %v66, %v66
    %71 = vst [vmem:[#allocation1] ss:$2 sm:$0xff] %v67
    %v72 = vld.sshfl [vmem:[#allocation1] sm:$0xff pattern:$0x75316420]
    %v73 = vld.sshfl [vmem:[#allocation1 + $0x8] sm:$0xff pattern:$0x75316420]
    %s74 = scalar_lea.vmem [#allocation1], 16
    %75 = vst [vmem:[%s74] ss:$2 sm:$0xff] %v68
    %v76 = vld.sshfl [vmem:[#allocation1 + $0x10] sm:$0xff pattern:$0x75316420]
    %v77 = vld.sshfl [vmem:[#allocation1 + $0x18] sm:$0xff pattern:$0x75316420]
    %v82 = vsel %vm46, %v72, 0.0
    %v83 = vsel %vm46, %v76, 0.0
    %v84 = vadd.f32 %v82, %v83
    %v85 = vsel %vm46, %v73, 0.0
    %v86 = vsel %vm46, %v77, 0.0
    %v87 = vadd.f32 %v85, %v86
    %v88 = vsel %vm46, %v84, 0.0
    %v89 = vsel %vm46, %v87, 0.0
    %v90 = vadd.f32 %v88, %v89
    %91 = vadd.xlane.f32.xlu0 %v90
    %v92 = vpop.xlane.xlu0 %91
    %v93 = vmul.f32 %v92, 0.001953125
    %v94 = vadd.f32 %v93, 1e-05
    %v95 = vrsqrt.pop %v94
    %v96 = vmul.f32 %v95, %v94
    %v97 = vmul.f32 %v96, %v95
    %v98 = vmul.f32 0.5, %v97
    %v99 = vsub.f32 1.5, %v98
    %v100 = vmul.f32 %v95, %v99
    %vm101 = vweird.f32 %v94
    %vm102 = vweird.f32 %v95
    %vm103 = vmor %vm101, %vm102
    %v104 = vsel %vm103, %v95, %v100
    %v105 = vld [vmem:[%s1] sm:$0xf]
    %v106 = vmul.f32 %v105, %v104
    %v107 = vld [vmem:[%s2] sm:$0xf]
    %v108 = vmul.f32 %v58, %v106
    %v109 = vsub.f32 %v107, %v108
    %110 = vxpose.xlu0.b32.start [1/16] %v106, 128
    %111 = vxpose.xlu0.b32.cont [2/16] 0.0, 128
    %112 = vxpose.xlu0.b32.cont [3/16] 0.0, 128
    %113 = vxpose.xlu0.b32.cont [4/16] 0.0, 128
    %114 = vxpose.xlu0.b32.cont [5/16] 0.0, 128
    %115 = vxpose.xlu0.b32.cont [6/16] 0.0, 128
    %116 = vxpose.xlu0.b32.cont [7/16] 0.0, 128
    %117 = vxpose.xlu0.b32.cont [8/16] 0.0, 128
    %118 = vxpose.xlu0.b32.cont [9/16] 0.0, 128
    %119 = vxpose.xlu0.b32.cont [10/16] 0.0, 128
    %120 = vxpose.xlu0.b32.cont [11/16] 0.0, 128
    %121 = vxpose.xlu0.b32.cont [12/16] 0.0, 128
    %122 = vxpose.xlu0.b32.cont [13/16] 0.0, 128
    %123 = vxpose.xlu0.b32.cont [14/16] 0.0, 128
    %124 = vxpose.xlu0.b32.cont [15/16] 0.0, 128
    %125 = vxpose.xlu0.b32.end [16/16] 0.0, 128
    %v126 = vpop.trf.xlu0
    %v127 = vpop.trf.xlu0
    %v128 = vpop.trf.xlu0
    %v129 = vpop.trf.xlu0
    %v130 = vpop.trf.xlu0
    %v131 = vpop.trf.xlu0
    %v132 = vpop.trf.xlu0
    %v133 = vpop.trf.xlu0
    %v134 = vpop.trf.xlu0
    %v135 = vpop.trf.xlu0
    %v136 = vpop.trf.xlu0
    %v137 = vpop.trf.xlu0
    %v138 = vpop.trf.xlu0
    %v139 = vpop.trf.xlu0
    %v140 = vpop.trf.xlu0
    %v141 = vpop.trf.xlu0
    %v142 = vperm.slane %v126, 0
    %v143 = vlaneseq
    %v144 = vshrl.u32 %v143, 7
    %146 = vset.pattern.permute.xlu0 %v144
    %147 = vperm.xlu0 %146, %v142
    %v148 = vpop.permute.xlu0 %147
    %v149 = vperm.slane %v126, 1
    %v150 = vlaneseq
    %v151 = vshrl.u32 %v150, 7
    %153 = vset.pattern.permute.xlu0 %v151
    %154 = vperm.xlu0 %153, %v149
    %v155 = vpop.permute.xlu0 %154
    %156 = vxpose.xlu0.b32.start [1/16] %v109, 128
    %157 = vxpose.xlu0.b32.cont [2/16] 0.0, 128
    %158 = vxpose.xlu0.b32.cont [3/16] 0.0, 128
    %159 = vxpose.xlu0.b32.cont [4/16] 0.0, 128
    %160 = vxpose.xlu0.b32.cont [5/16] 0.0, 128
    %161 = vxpose.xlu0.b32.cont [6/16] 0.0, 128
    %162 = vxpose.xlu0.b32.cont [7/16] 0.0, 128
    %163 = vxpose.xlu0.b32.cont [8/16] 0.0, 128
    %164 = vxpose.xlu0.b32.cont [9/16] 0.0, 128
    %165 = vxpose.xlu0.b32.cont [10/16] 0.0, 128
    %166 = vxpose.xlu0.b32.cont [11/16] 0.0, 128
    %167 = vxpose.xlu0.b32.cont [12/16] 0.0, 128
    %168 = vxpose.xlu0.b32.cont [13/16] 0.0, 128
    %169 = vxpose.xlu0.b32.cont [14/16] 0.0, 128
    %170 = vxpose.xlu0.b32.cont [15/16] 0.0, 128
    %171 = vxpose.xlu0.b32.end [16/16] 0.0, 128
    %v172 = vpop.trf.xlu0
    %v173 = vpop.trf.xlu0
    %v174 = vpop.trf.xlu0
    %v175 = vpop.trf.xlu0
    %v176 = vpop.trf.xlu0
    %v177 = vpop.trf.xlu0
    %v178 = vpop.trf.xlu0
    %v179 = vpop.trf.xlu0
    %v180 = vpop.trf.xlu0
    %v181 = vpop.trf.xlu0
    %v182 = vpop.trf.xlu0
    %v183 = vpop.trf.xlu0
    %v184 = vpop.trf.xlu0
    %v185 = vpop.trf.xlu0
    %v186 = vpop.trf.xlu0
    %v187 = vpop.trf.xlu0
    %v188 = vperm.slane %v172, 0
    %v189 = vlaneseq
    %v190 = vshrl.u32 %v189, 7
    %192 = vset.pattern.permute.xlu0 %v190
    %193 = vperm.xlu0 %192, %v188
    %v194 = vpop.permute.xlu0 %193
    %v195 = vperm.slane %v172, 1
    %v196 = vlaneseq
    %v197 = vshrl.u32 %v196, 7
    %199 = vset.pattern.permute.xlu0 %v197
    %200 = vperm.xlu0 %199, %v195
    %v201 = vpop.permute.xlu0 %200
    %v205 = vunpack.c.l.s4 839922192
    %v206 = vunpack.c.0.s8 %v205
    %v207 = vperm.slane %v148, %v206
    %v209 = vunpack.c.l.s4 839922192
    %v210 = vunpack.c.0.s8 %v209
    %v211 = vperm.slane %v155, %v210
    %v214 = vmul.f32 %v31, %v207
    %v215 = vmul.f32 %v32, %v211
    %v219 = vunpack.c.l.s4 839922192
    %v220 = vunpack.c.0.s8 %v219
    %v221 = vperm.slane %v194, %v220
    %v223 = vunpack.c.l.s4 839922192
    %v224 = vunpack.c.0.s8 %v223
    %v225 = vperm.slane %v201, %v224
    %v228 = vadd.f32 %v214, %v221
    %v229 = vadd.f32 %v215, %v225
    %230 = vst [vmem:[#allocation5] sm:$0xff] %v228
    %231 = vst [vmem:[#allocation5 + $0x8] sm:$0xff] %v229
    // Predicated region
    $region18: #{tpu_custom_call.1} parent=1 // pred_check
      _
    $region19: #{tpu_custom_call.1} parent=1 // pred_check_branch
      %233 = sbr.rel (0) target = $region21
    $region20: #{tpu_custom_call.1} parent=1 // pred_region
      %235 = vsyncadd [#allocation4], 0
      %s236 = sshll.u32 [#allocation5], 4
      %s237 = int_to_ptr.vmem [resolvable:$true] %s236
      %s238 = sshll.u32 %s3, 4
      %s239 = int_to_ptr.hbm [resolvable:$true] %s238
      %244 = dma.vmem_to_hbm [thread:$0]  %s237, 256, %s239, [#allocation4], 128, 128, 8
    $region21: #{tpu_custom_call.1} parent=1 // pred_fallthru
      _
    // Predicated region
    $region22: #{tpu_custom_call.1} parent=1 // pred_check
      _
    $region23: #{tpu_custom_call.1} parent=1 // pred_check_branch
      %246 = sbr.rel (0) target = $region25
    $region24: #{tpu_custom_call.1} parent=1 // pred_region
      %248 = dma.done [#allocation4], 256
    $region25: #{tpu_custom_call.1} parent=1 // pred_fallthru
      _
    %249 = vsyncpa [#allocation3], 1
    %250 = vsyncpa [#allocation4], 1

</llo_original>
